<compile_context>
chip_gen: v5e
topology: v5e:2x2
jax: 0.10.0
libtpu: 0.0.40
codegen_flags: <defaults>
</compile_context>

<pallas_src>
import functools

import jax
import jax.numpy as jnp
from jax.experimental import pallas as pl
from jax.experimental.pallas import tpu as pltpu


def _round_up(n: int, m: int) -> int:
    return ((n + m - 1) // m) * m


def _choose_row_block(n_rows: int, target: int) -> int:
    """Largest multiple of 8 <= target that (preferably) divides n_rows."""
    cap = max(8, min(int(target), _round_up(n_rows, 8)))
    cap -= cap % 8
    for r in range(cap, max(cap // 2, 8) - 1, -8):
        if n_rows % r == 0:
            return r                       # exact tiling: no partial tail
    return cap                             # ragged tail handled by Pallas OOB masking


def _choose_hidden_tile(d_hid: int, target: int) -> int:
    """Hidden-dim tile: full d_hid if small, else a 128-multiple divisor."""
    if d_hid <= target:
        return d_hid
    for t in range(target - target % 128, 127, -128):
        if d_hid % t == 0:
            return t
    return d_hid                           # fallback: no hidden tiling


def _mish(h):
    # mish(z) = z * tanh(softplus(z)).  With t = 1 + exp(min(z, 20)):
    #   tanh(softplus(z)) = (t^2 - 1) / (t^2 + 1)
    # (min(z,20) reproduces PyTorch's softplus threshold; for z>20 the ratio
    # rounds to 1.0 in f32, matching tanh(z)).  One exp + one approx
    # reciprocal instead of exp+log+tanh -> fewer EUP pushes.
    t = 1.0 + jnp.exp(jnp.minimum(h, 20.0))
    t2 = t * t
    return h * (t2 - 1.0) * pl.reciprocal(t2 + 1.0, approx=True)


def _ffn_kernel(*refs, apply_dropout: bool, inv_keep: float, eps: float):
    if apply_dropout:
        (x_ref, mask_ref, w1_ref, b1_ref, w2_ref, b2_ref,
         g_ref, beta_ref, o_ref, acc_ref) = refs
    else:
        (x_ref, w1_ref, b1_ref, w2_ref, b2_ref,
         g_ref, beta_ref, o_ref, acc_ref) = refs
        mask_ref = None

    k = pl.program_id(1)

    @pl.when(k == 0)
    def _():
        acc_ref[...] = jnp.zeros_like(acc_ref)

    # --- MXU path: bf16 inputs, f32 accumulation ---------------------------
    x_bf = x_ref[...].astype(jnp.bfloat16)                       # (rb, d_in)
    h = jnp.dot(x_bf, w1_ref[...], preferred_element_type=jnp.float32)
    h = h + b1_ref[...]                                          # f32 (rb, tk)
    h = _mish(h)                                                 # f32
    acc_ref[...] += jnp.dot(h.astype(jnp.bfloat16), w2_ref[...],
                            preferred_element_type=jnp.float32)  # (rb, d_in)

    # --- finalize: bias2 + dropout + residual + LayerNorm -------------------
    @pl.when(k == pl.num_programs(1) - 1)
    def _():
        x = x_ref[...].astype(jnp.float32)
        y = acc_ref[...] + b2_ref[...]
        if apply_dropout:
            # mask holds {0,1}; scale folded as an f32 constant.
            y = y * (mask_ref[...].astype(jnp.float32) * inv_keep)
        y = y + x                                                # residual

        # LayerNorm over last dim, eps = 1e-6, biased variance (PyTorch).
        mean = jnp.mean(y, axis=-1, keepdims=True)
        c = y - mean
        var = jnp.mean(c * c, axis=-1, keepdims=True)
        inv = jax.lax.rsqrt(var + eps)
        o_ref[...] = (c * inv * g_ref[...] + beta_ref[...]).astype(o_ref.dtype)


def feed_forward_layer(x, w1, b1, w2, b2, gamma, beta, *,
                       dropout_p: float = 0.1, training: bool = False,
                       dropout_keep=None, row_block: int = 512,
                       hidden_block: int = 512, eps: float = 1e-6):
    """x: (..., d_in). w1: (d_in, d_hid), w2: (d_hid, d_in)."""
    orig_shape = x.shape
    d_in = orig_shape[-1]
    d_hid = w1.shape[1]
    x2 = x.reshape(-1, d_in)               # no dtype copy; cast happens in-kernel
    n_rows = x2.shape[0]

    apply_dropout = bool(training) and dropout_p > 0.0
    if apply_dropout:
        assert 0.0 < dropout_p < 1.0, "dropout_p must be in (0, 1) when training"
        assert dropout_keep is not None, \
            "training mode needs a boolean keep mask with the same shape as x"
        mask2 = dropout_keep.reshape(-1, d_in).astype(jnp.bfloat16)   # {0,1}
    inv_keep = 1.0 / (1.0 - float(dropout_p))

    rb = _choose_row_block(n_rows, row_block)
    tk = _choose_hidden_tile(d_hid, hidden_block)
    n_row_blocks = -(-n_rows // rb)
    nk = d_hid // tk if d_hid % tk == 0 else 1
    if nk == 1:
        tk = d_hid

    # bf16 weights feed the MXU; biases / LN params stay f32 (tiny).
    w1b = w1.astype(jnp.bfloat16)
    w2b = w2.astype(jnp.bfloat16)
    b1_ = b1.reshape(1, d_hid).astype(jnp.float32)
    b2_ = b2.reshape(1, d_in).astype(jnp.float32)
    g_ = gamma.reshape(1, d_in).astype(jnp.float32)
    be_ = beta.reshape(1, d_in).astype(jnp.float32)

    row_spec = pl.BlockSpec((rb, d_in), lambda i, k: (i, 0))
    single = dict(pipeline_mode=pl.Buffered(1))   # fetched once -> one buffer

    in_specs = [row_spec]
    operands = [x2]
    if apply_dropout:
        in_specs.append(pl.BlockSpec((rb, d_in), lambda i, k: (i, 0)))
        operands.append(mask2)

    if nk == 1:
        # Weights fully resident, single-buffered (constant index map).
        w1_spec = pl.BlockSpec((d_in, tk), lambda i, k: (0, 0), **single)
        b1_spec = pl.BlockSpec((1, tk), lambda i, k: (0, 0), **single)
        w2_spec = pl.BlockSpec((tk, d_in), lambda i, k: (0, 0), **single)
    else:
        # Stream hidden-dim tiles; default double-buffering pipelines the DMA.
        w1_spec = pl.BlockSpec((d_in, tk), lambda i, k: (0, k))
        b1_spec = pl.BlockSpec((1, tk), lambda i, k: (0, k))
        w2_spec = pl.BlockSpec((tk, d_in), lambda i, k: (k, 0))

    in_specs += [w1_spec, b1_spec, w2_spec,
                 pl.BlockSpec((1, d_in), lambda i, k: (0, 0), **single),   # b2
                 pl.BlockSpec((1, d_in), lambda i, k: (0, 0), **single),   # gamma
                 pl.BlockSpec((1, d_in), lambda i, k: (0, 0), **single)]   # beta
    operands += [w1b, b1_, w2b, b2_, g_, be_]

    # Explicit VMEM budget (v5e default scoped limit is only 16 MiB).
    itemsize_x = x2.dtype.itemsize
    wbuf = 1 if nk == 1 else 2
    est = (rb * d_in * (2 * itemsize_x + 2 * itemsize_x + 4)          # x, out, acc
           + (rb * d_in * 2 * 2 if apply_dropout else 0)              # bf16 mask
           + d_in * tk * 2 * wbuf * 2                                 # w1 + w2
           + (d_hid + 3 * d_in) * 4 * 2)                              # biases/LN
    vmem_limit = int(min(max(2 * est + (1 << 20), 32 << 20), 64 << 20))

    kernel = functools.partial(_ffn_kernel, apply_dropout=apply_dropout,
                               inv_keep=float(inv_keep), eps=float(eps))
    out = pl.pallas_call(
        kernel,
        out_shape=jax.ShapeDtypeStruct((n_rows, d_in), x.dtype),
        grid_spec=pltpu.PrefetchScalarGridSpec(
            num_scalar_prefetch=0,
            grid=(n_row_blocks, nk),
            in_specs=in_specs,
            out_specs=row_spec,
            scratch_shapes=[pltpu.VMEM((rb, d_in), jnp.float32)],
        ),
        compiler_params=pltpu.CompilerParams(
            dimension_semantics=("parallel", "arbitrary"),
            vmem_limit_bytes=vmem_limit,
        ),
    )(*operands)
    return out.reshape(orig_shape)


def feed_forward_reference(x, w1, b1, w2, b2, gamma, beta, *,
                           dropout_p: float = 0.1, training: bool = False,
                           dropout_keep=None, eps: float = 1e-6):
    """Pure-JAX f32 reference matching the PyTorch module."""
    hp = jax.lax.Precision.HIGHEST
    h = jnp.dot(x, w1, precision=hp) + b1
    sp = jnp.where(h > 20.0, h, jnp.log1p(jnp.exp(jnp.minimum(h, 20.0))))
    h = h * jnp.tanh(sp)                                   # F.mish
    y = jnp.dot(h, w2, precision=hp) + b2
    if training and dropout_p > 0.0:
        y = jnp.where(dropout_keep, y / (1.0 - dropout_p), 0.0)
    y = y + x
    mean = jnp.mean(y, axis=-1, keepdims=True)
    var = jnp.mean((y - mean) ** 2, axis=-1, keepdims=True)
    return (y - mean) * jax.lax.rsqrt(var + eps) * gamma + beta


if __name__ == "__main__":
    # Small shapes consistent with the module (lane-aligned hidden sizes).
    B, L, D_IN, D_HID = 2, 8, 128, 256
    key = jax.random.PRNGKey(0)
    ks = jax.random.split(key, 6)
    x = jax.random.normal(ks[0], (B, L, D_IN), dtype=jnp.float32)
    w1 = jax.random.normal(ks[1], (D_IN, D_HID), dtype=jnp.float32) * (D_IN ** -0.5)
    b1 = jax.random.normal(ks[2], (D_HID,), dtype=jnp.float32) * 0.02
    w2 = jax.random.normal(ks[3], (D_HID, D_IN), dtype=jnp.float32) * (D_HID ** -0.5)
    b2 = jax.random.normal(ks[4], (D_IN,), dtype=jnp.float32) * 0.02
    gamma = jnp.ones((D_IN,), dtype=jnp.float32)
    beta = jnp.zeros((D_IN,), dtype=jnp.float32)

    # Eval mode: dropout is the identity.  Tolerance is loosened slightly vs
    # the all-f32 version because the MXU now runs in bf16 (f32 accumulate).
    y = feed_forward_layer(x, w1, b1, w2, b2, gamma, beta,
                           dropout_p=0.1, training=False)
    y = jax.block_until_ready(y)
    y_ref = feed_forward_reference(x, w1, b1, w2, b2, gamma, beta,
                                   dropout_p=0.1, training=False)
    assert y.shape == x.shape
    assert jnp.allclose(y, y_ref, atol=3e-2, rtol=3e-2), \
        "eval-mode mismatch vs reference"

    # Training mode: explicit host-side keep mask (streamed as bf16 {0,1}),
    # so the result is deterministic and checkable against the reference.
    keep = jax.random.bernoulli(ks[5], 1.0 - 0.1, x.shape)
    y_tr = feed_forward_layer(x, w1, b1, w2, b2, gamma, beta,
                              dropout_p=0.1, training=True, dropout_keep=keep)
    y_tr = jax.block_until_ready(y_tr)
    y_tr_ref = feed_forward_reference(x, w1, b1, w2, b2, gamma, beta,
                                      dropout_p=0.1, training=True,
                                      dropout_keep=keep)
    assert jnp.allclose(y_tr, y_tr_ref, atol=3e-2, rtol=3e-2), \
        "training-mode mismatch vs reference"

    print("KERNEL_OK")
</pallas_src>

<mosaic_0001>
module attributes {stable_mosaic.version = 11 : i64} {
  func.func @_ffn_kernel(%arg0: i32, %arg1: i32, %arg2: memref<16x128xf32, #tpu.memory_space<vmem>>, %arg3: memref<128x256xbf16, #tpu.memory_space<vmem>>, %arg4: memref<1x256xf32, #tpu.memory_space<vmem>>, %arg5: memref<256x128xbf16, #tpu.memory_space<vmem>>, %arg6: memref<1x128xf32, #tpu.memory_space<vmem>>, %arg7: memref<1x128xf32, #tpu.memory_space<vmem>>, %arg8: memref<1x128xf32, #tpu.memory_space<vmem>>, %arg9: memref<16x128xf32, #tpu.memory_space<vmem>>, %arg10: memref<16x128xf32, #tpu.memory_space<vmem>>) attributes {dimension_semantics = [#tpu.dimension_semantics<parallel>, #tpu.dimension_semantics<arbitrary>], iteration_bounds = array<i64: 1, 1>, scalar_prefetch = 0 : i64, scratch_operands = 1 : i64, tpu.core_type = #tpu.core_type<tc>, window_params = [{transform_indices = @transform_0, window_bounds = array<i64: 16, 128>}, {pipeline_mode = #tpu.pipeline_mode<synchronous>, transform_indices = @transform_1, window_bounds = array<i64: 128, 256>}, {pipeline_mode = #tpu.pipeline_mode<synchronous>, transform_indices = @transform_2, window_bounds = array<i64: 1, 256>}, {pipeline_mode = #tpu.pipeline_mode<synchronous>, transform_indices = @transform_3, window_bounds = array<i64: 256, 128>}, {pipeline_mode = #tpu.pipeline_mode<synchronous>, transform_indices = @transform_4, window_bounds = array<i64: 1, 128>}, {pipeline_mode = #tpu.pipeline_mode<synchronous>, transform_indices = @transform_5, window_bounds = array<i64: 1, 128>}, {pipeline_mode = #tpu.pipeline_mode<synchronous>, transform_indices = @transform_6, window_bounds = array<i64: 1, 128>}, {transform_indices = @transform_7, window_bounds = array<i64: 16, 128>}]} {
    %c0_i32 = arith.constant 0 : i32
    %0 = arith.cmpi eq, %arg1, %c0_i32 : i32
    %1 = arith.extui %0 : i1 to i32
    %c0_i32_0 = arith.constant 0 : i32
    %2 = arith.cmpi ne, %1, %c0_i32_0 : i32
    scf.if %2 {
      %cst_19 = arith.constant 0.000000e+00 : f32
      %32 = vector.broadcast %cst_19 : f32 to vector<16x128xf32>
      %c0_20 = arith.constant 0 : index
      %c0_21 = arith.constant 0 : index
      %33 = vector.load %arg10[%c0_20, %c0_21] : memref<16x128xf32, #tpu.memory_space<vmem>>, vector<16x128xf32>
      tpu.vector_store %arg10[%c0_20, %c0_21], %32 {strides = array<i32>} : memref<16x128xf32, #tpu.memory_space<vmem>>, vector<16x128xf32>,
    } else {
    }
    %c0 = arith.constant 0 : index
    %c0_1 = arith.constant 0 : index
    %3 = vector.load %arg2[%c0, %c0_1] : memref<16x128xf32, #tpu.memory_space<vmem>>, vector<16x128xf32>
    %4 = arith.truncf %3 : vector<16x128xf32> to vector<16x128xbf16>
    %c0_2 = arith.constant 0 : index
    %c0_3 = arith.constant 0 : index
    %5 = vector.load %arg3[%c0_2, %c0_3] : memref<128x256xbf16, #tpu.memory_space<vmem>>, vector<128x256xbf16>
    %cst = arith.constant dense<0.000000e+00> : vector<16x256xf32>
    %6 = tpu.matmul %4, %5, %cst {dimension_numbers = #tpu.dot_dimension_numbers<[1], [0], [0], [1], [0, 0, 1, 1], [], []>} : vector<16x128xbf16>, vector<128x256xbf16>, vector<16x256xf32> -> vector<16x256xf32>
    %c0_4 = arith.constant 0 : index
    %c0_5 = arith.constant 0 : index
    %7 = vector.load %arg4[%c0_4, %c0_5] : memref<1x256xf32, #tpu.memory_space<vmem>>, vector<1x256xf32>
    %8 = vector.broadcast %7 : vector<1x256xf32> to vector<16x256xf32>
    %9 = arith.addf %6, %8 : vector<16x256xf32>
    %cst_6 = arith.constant 2.000000e+01 : f32
    %10 = vector.broadcast %cst_6 : f32 to vector<16x256xf32>
    %11 = arith.minimumf %9, %10 : vector<16x256xf32>
    %12 = math.exp %11 : vector<16x256xf32>
    %cst_7 = arith.constant 1.000000e+00 : f32
    %13 = vector.broadcast %cst_7 : f32 to vector<16x256xf32>
    %14 = arith.addf %13, %12 : vector<16x256xf32>
    %15 = arith.mulf %14, %14 : vector<16x256xf32>
    %cst_8 = arith.constant 1.000000e+00 : f32
    %16 = vector.broadcast %cst_8 : f32 to vector<16x256xf32>
    %17 = arith.subf %15, %16 : vector<16x256xf32>
    %18 = arith.mulf %9, %17 : vector<16x256xf32>
    %cst_9 = arith.constant 1.000000e+00 : f32
    %19 = vector.broadcast %cst_9 : f32 to vector<16x256xf32>
    %20 = arith.addf %15, %19 : vector<16x256xf32>
    %21 = tpu.reciprocal %20 {approx = true} : vector<16x256xf32> -> vector<16x256xf32>
    %22 = arith.mulf %18, %21 : vector<16x256xf32>
    %c0_10 = arith.constant 0 : index
    %c0_11 = arith.constant 0 : index
    %23 = vector.load %arg10[%c0_10, %c0_11] : memref<16x128xf32, #tpu.memory_space<vmem>>, vector<16x128xf32>
    %24 = arith.truncf %22 : vector<16x256xf32> to vector<16x256xbf16>
    %c0_12 = arith.constant 0 : index
    %c0_13 = arith.constant 0 : index
    %25 = vector.load %arg5[%c0_12, %c0_13] : memref<256x128xbf16, #tpu.memory_space<vmem>>, vector<256x128xbf16>
    %cst_14 = arith.constant dense<0.000000e+00> : vector<16x128xf32>
    %26 = tpu.matmul %24, %25, %cst_14 {dimension_numbers = #tpu.dot_dimension_numbers<[1], [0], [0], [1], [0, 0, 1, 1], [], []>} : vector<16x256xbf16>, vector<256x128xbf16>, vector<16x128xf32> -> vector<16x128xf32>
    %27 = arith.addf %23, %26 : vector<16x128xf32>
    %c0_15 = arith.constant 0 : index
    %c0_16 = arith.constant 0 : index
    %28 = vector.load %arg10[%c0_15, %c0_16] : memref<16x128xf32, #tpu.memory_space<vmem>>, vector<16x128xf32>
    tpu.vector_store %arg10[%c0_15, %c0_16], %27 {strides = array<i32>} : memref<16x128xf32, #tpu.memory_space<vmem>>, vector<16x128xf32>,
    %c0_i32_17 = arith.constant 0 : i32
    %29 = arith.cmpi eq, %arg1, %c0_i32_17 : i32
    %30 = arith.extui %29 : i1 to i32
    %c0_i32_18 = arith.constant 0 : i32
    %31 = arith.cmpi ne, %30, %c0_i32_18 : i32
    scf.if %31 {
      %c0_19 = arith.constant 0 : index
      %c0_20 = arith.constant 0 : index
      %32 = vector.load %arg2[%c0_19, %c0_20] : memref<16x128xf32, #tpu.memory_space<vmem>>, vector<16x128xf32>
      %c0_21 = arith.constant 0 : index
      %c0_22 = arith.constant 0 : index
      %33 = vector.load %arg10[%c0_21, %c0_22] : memref<16x128xf32, #tpu.memory_space<vmem>>, vector<16x128xf32>
      %c0_23 = arith.constant 0 : index
      %c0_24 = arith.constant 0 : index
      %34 = vector.load %arg6[%c0_23, %c0_24] : memref<1x128xf32, #tpu.memory_space<vmem>>, vector<1x128xf32>
      %35 = vector.broadcast %34 : vector<1x128xf32> to vector<16x128xf32>
      %36 = arith.addf %33, %35 : vector<16x128xf32>
      %37 = arith.addf %36, %32 : vector<16x128xf32>
      %cst_25 = arith.constant dense<0.000000e+00> : vector<16xf32>
      %38 = vector.multi_reduction <add>, %37, %cst_25 [1] : vector<16x128xf32> to vector<16xf32>
      %39 = vector.shape_cast %38 : vector<16xf32> to vector<16x1xf32>
      %cst_26 = arith.constant 1.280000e+02 : f32
      %40 = vector.broadcast %cst_26 : f32 to vector<16x1xf32>
      %41 = arith.divf %39, %40 : vector<16x1xf32>
      %42 = vector.broadcast %41 : vector<16x1xf32> to vector<16x128xf32>
      %43 = arith.subf %37, %42 : vector<16x128xf32>
      %44 = arith.mulf %43, %43 : vector<16x128xf32>
      %cst_27 = arith.constant dense<0.000000e+00> : vector<16xf32>
      %45 = vector.multi_reduction <add>, %44, %cst_27 [1] : vector<16x128xf32> to vector<16xf32>
      %46 = vector.shape_cast %45 : vector<16xf32> to vector<16x1xf32>
      %cst_28 = arith.constant 1.280000e+02 : f32
      %47 = vector.broadcast %cst_28 : f32 to vector<16x1xf32>
      %48 = arith.divf %46, %47 : vector<16x1xf32>
      %cst_29 = arith.constant 9.99999997E-7 : f32
      %49 = vector.broadcast %cst_29 : f32 to vector<16x1xf32>
      %50 = arith.addf %48, %49 : vector<16x1xf32>
      %51 = math.rsqrt %50 : vector<16x1xf32>
      %52 = vector.broadcast %51 : vector<16x1xf32> to vector<16x128xf32>
      %53 = arith.mulf %43, %52 : vector<16x128xf32>
      %c0_30 = arith.constant 0 : index
      %c0_31 = arith.constant 0 : index
      %54 = vector.load %arg7[%c0_30, %c0_31] : memref<1x128xf32, #tpu.memory_space<vmem>>, vector<1x128xf32>
      %55 = vector.broadcast %54 : vector<1x128xf32> to vector<16x128xf32>
      %56 = arith.mulf %53, %55 : vector<16x128xf32>
      %c0_32 = arith.constant 0 : index
      %c0_33 = arith.constant 0 : index
      %57 = vector.load %arg8[%c0_32, %c0_33] : memref<1x128xf32, #tpu.memory_space<vmem>>, vector<1x128xf32>
      %58 = vector.broadcast %57 : vector<1x128xf32> to vector<16x128xf32>
      %59 = arith.addf %56, %58 : vector<16x128xf32>
      %c0_34 = arith.constant 0 : index
      %c0_35 = arith.constant 0 : index
      %60 = vector.load %arg9[%c0_34, %c0_35] : memref<16x128xf32, #tpu.memory_space<vmem>>, vector<16x128xf32>
      tpu.vector_store %arg9[%c0_34, %c0_35], %59 {strides = array<i32>} : memref<16x128xf32, #tpu.memory_space<vmem>>, vector<16x128xf32>,
    } else {
    }
    return
  }
  func.func @transform_0(%arg0: i32, %arg1: i32) -> (i32, i32) {
    %c0_i32 = arith.constant 0 : i32
    %c0_i32_0 = arith.constant 0 : i32
    return %arg0, %c0_i32 : i32, i32
  }
  func.func @transform_1(%arg0: i32, %arg1: i32) -> (i32, i32) {
    %c0_i32 = arith.constant 0 : i32
    %c0_i32_0 = arith.constant 0 : i32
    %c0_i32_1 = arith.constant 0 : i32
    return %c0_i32, %c0_i32_0 : i32, i32
  }
  func.func @transform_2(%arg0: i32, %arg1: i32) -> (i32, i32) {
    %c0_i32 = arith.constant 0 : i32
    %c0_i32_0 = arith.constant 0 : i32
    %c0_i32_1 = arith.constant 0 : i32
    return %c0_i32, %c0_i32_0 : i32, i32
  }
  func.func @transform_3(%arg0: i32, %arg1: i32) -> (i32, i32) {
    %c0_i32 = arith.constant 0 : i32
    %c0_i32_0 = arith.constant 0 : i32
    %c0_i32_1 = arith.constant 0 : i32
    return %c0_i32, %c0_i32_0 : i32, i32
  }
  func.func @transform_4(%arg0: i32, %arg1: i32) -> (i32, i32) {
    %c0_i32 = arith.constant 0 : i32
    %c0_i32_0 = arith.constant 0 : i32
    %c0_i32_1 = arith.constant 0 : i32
    return %c0_i32, %c0_i32_0 : i32, i32
  }
  func.func @transform_5(%arg0: i32, %arg1: i32) -> (i32, i32) {
    %c0_i32 = arith.constant 0 : i32
    %c0_i32_0 = arith.constant 0 : i32
    %c0_i32_1 = arith.constant 0 : i32
    return %c0_i32, %c0_i32_0 : i32, i32
  }
  func.func @transform_6(%arg0: i32, %arg1: i32) -> (i32, i32) {
    %c0_i32 = arith.constant 0 : i32
    %c0_i32_0 = arith.constant 0 : i32
    %c0_i32_1 = arith.constant 0 : i32
    return %c0_i32, %c0_i32_0 : i32, i32
  }
  func.func @transform_7(%arg0: i32, %arg1: i32) -> (i32, i32) {
    %c0_i32 = arith.constant 0 : i32
    %c0_i32_0 = arith.constant 0 : i32
    return %arg0, %c0_i32 : i32, i32
  }
}

</mosaic_0001>

<llo_original>
// kernel: tpu_custom_call.1
$region0: #{tpu_custom_call.1}
  #allocation0 [shape = 'u32[]', space=smem, size = 0x4, offset = 0x4, fixed_abs, tag = 'smem constant byte address 0x4 - core index']
  #allocation1 [shape = 'u32[72,128]{1,0:T(1,128)}', space=vmem, size = 0x9000, scoped, tag = 'internal scratch']
  #allocation2 [shape = 'f32[16,128]{1,0:T(8,128)}', space=vmem, size = 0x2000, scoped, tag = 'scratch operand']
  %s0 = inlined_call_operand.hbm [shape: f32[16,128], index: 0, kind: input, shape index: {}]
  %s1 = inlined_call_operand.hbm [shape: bf16[128,256], index: 1, kind: input, shape index: {}]
  %s2 = inlined_call_operand.hbm [shape: f32[1,256], index: 2, kind: input, shape index: {}]
  %s3 = inlined_call_operand.hbm [shape: bf16[256,128], index: 3, kind: input, shape index: {}]
  %s4 = inlined_call_operand.vmem [shape: f32[1,128], index: 4, kind: input, shape index: {}]
  %s5 = inlined_call_operand.vmem [shape: f32[1,128], index: 5, kind: input, shape index: {}]
  %s6 = inlined_call_operand.vmem [shape: f32[1,128], index: 6, kind: input, shape index: {}]
  %s7 = inlined_call_operand.hbm [shape: f32[16,128], index: 7, kind: output, shape index: {}]
  %s8 = sld [smem:[#allocation0]]
  $region62: #{tpu_custom_call.1} parent=0
    _
  %s10 = ssub.s32 1, %s8
  %s11 = scalar_select 0, %s10, %s8
  $region1: #{tpu_custom_call.1} parent=0
    #allocation3 [shape = 'u8[8192]{0}', space=vmem, size = 0x2000, scoped, tag = 'input window, operand 0, single buffered']
    #allocation4 [shape = 's32[1]{0}', space=sflag, size = 0x4, scoped, tag = 'scoped memory for tpu_custom_call.1']
    #allocation5 [shape = 's32[1]{0}', space=sflag, size = 0x4, scoped, tag = 'scoped memory for tpu_custom_call.1']
    #allocation6 [shape = 'u8[65536]{0}', space=vmem, size = 0x10000, scoped, tag = 'input window, operand 1, single buffered']
    #allocation7 [shape = 's32[1]{0}', space=sflag, size = 0x4, scoped, tag = 'scoped memory for tpu_custom_call.1']
    #allocation8 [shape = 'u8[1024]{0}', space=vmem, size = 0x400, scoped, tag = 'input window, operand 2, single buffered']
    #allocation9 [shape = 'u8[65536]{0}', space=vmem, size = 0x10000, scoped, tag = 'input window, operand 3, single buffered']
    #allocation10 [shape = 's32[1]{0}', space=sflag, size = 0x4, scoped, tag = 'scoped memory for tpu_custom_call.1']
    #allocation11 [shape = 'u8[8192]{0}', space=vmem, size = 0x2000, scoped, tag = 'output window, operand 0, single buffered']
    %12 = vsyncpa [#allocation4], 0
    %13 = vsyncpa [#allocation7], 0
    %14 = vsyncpa [#allocation10], 0
    %15 = vsyncpa [#allocation5], 0
    // Predicated region
    $region2: #{tpu_custom_call.1} parent=1 // pred_check
      _
    $region3: #{tpu_custom_call.1} parent=1 // pred_check_branch
      %17 = sbr.rel (0) target = $region5
    $region4: #{tpu_custom_call.1} parent=1 // pred_region
      %19 = vsyncadd [#allocation4], 0
      %s20 = sshll.u32 %s0, 4
      %s21 = int_to_ptr.hbm [resolvable:$true] %s20
      %s22 = sshll.u32 [#allocation3], 4
      %s23 = int_to_ptr.vmem [resolvable:$true] %s22
      %28 = dma.hbm_to_vmem [thread:$0]  %s21, 256, %s23, [#allocation4], 128, 128, 8
    $region5: #{tpu_custom_call.1} parent=1 // pred_fallthru
      _
    // Predicated region
    $region6: #{tpu_custom_call.1} parent=1 // pred_check
      _
    $region7: #{tpu_custom_call.1} parent=1 // pred_check_branch
      %30 = sbr.rel (0) target = $region9
    $region8: #{tpu_custom_call.1} parent=1 // pred_region
      %32 = vsyncadd [#allocation7], 0
      %s33 = sshll.u32 %s1, 4
      %s34 = int_to_ptr.hbm [resolvable:$true] %s33
      %s35 = sshll.u32 [#allocation6], 4
      %s36 = int_to_ptr.vmem [resolvable:$true] %s35
      %41 = dma.hbm_to_vmem [thread:$0]  %s34, 2048, %s36, [#allocation7], 128, 128, 8
    $region9: #{tpu_custom_call.1} parent=1 // pred_fallthru
      _
    // Predicated region
    $region10: #{tpu_custom_call.1} parent=1 // pred_check
      _
    $region11: #{tpu_custom_call.1} parent=1 // pred_check_branch
      %43 = sbr.rel (0) target = $region13
    $region12: #{tpu_custom_call.1} parent=1 // pred_region
      %45 = vsyncadd [#allocation7], 0
      %s47 = sshll.u32 %s2, 4
      %s48 = int_to_ptr.hbm [resolvable:$true] %s47
      %s49 = sshll.u32 [#allocation8], 4
      %s50 = int_to_ptr.vmem [resolvable:$true] %s49
      %52 = dma.hbm_to_vmem [thread:$0]  %s48, 32, %s50, [#allocation7]
    $region13: #{tpu_custom_call.1} parent=1 // pred_fallthru
      _
    // Predicated region
    $region14: #{tpu_custom_call.1} parent=1 // pred_check
      _
    $region15: #{tpu_custom_call.1} parent=1 // pred_check_branch
      %54 = sbr.rel (0) target = $region17
    $region16: #{tpu_custom_call.1} parent=1 // pred_region
      %56 = vsyncadd [#allocation10], 0
      %s57 = sshll.u32 %s3, 4
      %s58 = int_to_ptr.hbm [resolvable:$true] %s57
      %s59 = sshll.u32 [#allocation9], 4
      %s60 = int_to_ptr.vmem [resolvable:$true] %s59
      %65 = dma.hbm_to_vmem [thread:$0]  %s58, 2048, %s60, [#allocation10], 64, 64, 4
    $region17: #{tpu_custom_call.1} parent=1 // pred_fallthru
      _
    // Predicated region
    $region18: #{tpu_custom_call.1} parent=1 // pred_check
      _
    $region19: #{tpu_custom_call.1} parent=1 // pred_check_branch
      %67 = sbr.rel (0) target = $region21
    $region20: #{tpu_custom_call.1} parent=1 // pred_region
      _
    $region21: #{tpu_custom_call.1} parent=1 // pred_fallthru
      _
    // Predicated region
    $region22: #{tpu_custom_call.1} parent=1 // pred_check
      _
    $region23: #{tpu_custom_call.1} parent=1 // pred_check_branch
      %69 = sbr.rel (0) target = $region25
    $region24: #{tpu_custom_call.1} parent=1 // pred_region
      _
    $region25: #{tpu_custom_call.1} parent=1 // pred_fallthru
      _
    // Predicated region
    $region26: #{tpu_custom_call.1} parent=1 // pred_check
      _
    $region27: #{tpu_custom_call.1} parent=1 // pred_check_branch
      %71 = sbr.rel (0) target = $region29
    $region28: #{tpu_custom_call.1} parent=1 // pred_region
      _
    $region29: #{tpu_custom_call.1} parent=1 // pred_fallthru
      _
    // Predicated region
    $region30: #{tpu_custom_call.1} parent=1 // pred_check
      _
    $region31: #{tpu_custom_call.1} parent=1 // pred_check_branch
      %73 = sbr.rel (0) target = $region33
    $region32: #{tpu_custom_call.1} parent=1 // pred_region
      %75 = dma.done [#allocation4], 256
    $region33: #{tpu_custom_call.1} parent=1 // pred_fallthru
      _
    // Predicated region
    $region34: #{tpu_custom_call.1} parent=1 // pred_check
      _
    $region35: #{tpu_custom_call.1} parent=1 // pred_check_branch
      %77 = sbr.rel (0) target = $region37
    $region36: #{tpu_custom_call.1} parent=1 // pred_region
      %79 = dma.done [#allocation7], 2048
    $region37: #{tpu_custom_call.1} parent=1 // pred_fallthru
      _
    // Predicated region
    $region38: #{tpu_custom_call.1} parent=1 // pred_check
      _
    $region39: #{tpu_custom_call.1} parent=1 // pred_check_branch
      %81 = sbr.rel (0) target = $region41
    $region40: #{tpu_custom_call.1} parent=1 // pred_region
      %83 = dma.done [#allocation7], 32
    $region41: #{tpu_custom_call.1} parent=1 // pred_fallthru
      _
    // Predicated region
    $region42: #{tpu_custom_call.1} parent=1 // pred_check
      _
    $region43: #{tpu_custom_call.1} parent=1 // pred_check_branch
      %85 = sbr.rel (0) target = $region45
    $region44: #{tpu_custom_call.1} parent=1 // pred_region
      %87 = dma.done [#allocation10], 2048
    $region45: #{tpu_custom_call.1} parent=1 // pred_fallthru
      _
    %p88 = scmp.eq.s32.totalorder 0, 0
    // Predicated region
    $region46: #{tpu_custom_call.1} parent=1 // pred_check
      %p89 = pneg %p88
    $region47: #{tpu_custom_call.1} parent=1 // pred_check_branch
      %91 = sbr.rel (%p89) target = $region49
    $region48: #{tpu_custom_call.1} parent=1 // pred_region
      %92 = vst [vmem:[#allocation2] sm:$0xff] 0.0
      %93 = vst [vmem:[#allocation2 + $0x8] sm:$0xff] 0.0
    $region49: #{tpu_custom_call.1} parent=1 // pred_fallthru
      _
    %v94 = vld [vmem:[#allocation3] sm:$0xff]
    %v95 = vld [vmem:[#allocation3 + $0x8] sm:$0xff]
    %v96 = vpack.c.bf16 %v95, %v94
    %v97 = vld [vmem:[#allocation6] sm:$0xff]
    %v98 = vld [vmem:[#allocation6 + $0x8] sm:$0xff]
    %v99 = vld [vmem:[#allocation6 + $0x10] sm:$0xff]
    %v100 = vld [vmem:[#allocation6 + $0x18] sm:$0xff]
    %v101 = vld [vmem:[#allocation6 + $0x20] sm:$0xff]
    %v102 = vld [vmem:[#allocation6 + $0x28] sm:$0xff]
    %v103 = vld [vmem:[#allocation6 + $0x30] sm:$0xff]
    %v104 = vld [vmem:[#allocation6 + $0x38] sm:$0xff]
    %v105 = vld [vmem:[#allocation6 + $0x40] sm:$0xff]
    %v106 = vld [vmem:[#allocation6 + $0x48] sm:$0xff]
    %v107 = vld [vmem:[#allocation6 + $0x50] sm:$0xff]
    %v108 = vld [vmem:[#allocation6 + $0x58] sm:$0xff]
    %v109 = vld [vmem:[#allocation6 + $0x60] sm:$0xff]
    %v110 = vld [vmem:[#allocation6 + $0x68] sm:$0xff]
    %v111 = vld [vmem:[#allocation6 + $0x70] sm:$0xff]
    %v112 = vld [vmem:[#allocation6 + $0x78] sm:$0xff]
    %v113 = vld [vmem:[#allocation8] sm:$0x3]
    %v115 = vperm.slane %v113, 0
    %v116 = vperm.slane %v113, 1
    %v135 = vunpack.c.l.b16 %v97
    %v136 = vunpack.c.h.b16 %v97
    %v137 = vunpack.c.l.b16 %v98
    %v138 = vunpack.c.h.b16 %v98
    %v139 = vunpack.c.l.b16 %v99
    %v140 = vunpack.c.h.b16 %v99
    %v141 = vunpack.c.l.b16 %v100
    %v142 = vunpack.c.h.b16 %v100
    %v143 = vunpack.c.l.b16 %v101
    %v144 = vunpack.c.h.b16 %v101
    %v145 = vunpack.c.l.b16 %v102
    %v146 = vunpack.c.h.b16 %v102
    %v147 = vunpack.c.l.b16 %v103
    %v148 = vunpack.c.h.b16 %v103
    %v149 = vunpack.c.l.b16 %v104
    %v150 = vunpack.c.h.b16 %v104
    %v151 = vunpack.c.l.b16 %v105
    %v152 = vunpack.c.h.b16 %v105
    %v153 = vunpack.c.l.b16 %v106
    %v154 = vunpack.c.h.b16 %v106
    %v155 = vunpack.c.l.b16 %v107
    %v156 = vunpack.c.h.b16 %v107
    %v157 = vunpack.c.l.b16 %v108
    %v158 = vunpack.c.h.b16 %v108
    %v159 = vunpack.c.l.b16 %v109
    %v160 = vunpack.c.h.b16 %v109
    %v161 = vunpack.c.l.b16 %v110
    %v162 = vunpack.c.h.b16 %v110
    %v163 = vunpack.c.l.b16 %v111
    %v164 = vunpack.c.h.b16 %v111
    %v165 = vunpack.c.l.b16 %v112
    %v166 = vunpack.c.h.b16 %v112
    %v167 = vpack.c.b16 %v137, %v135
    %v168 = vpack.c.b16 %v138, %v136
    %v169 = vpack.c.b16 %v141, %v139
    %v170 = vpack.c.b16 %v142, %v140
    %v171 = vpack.c.b16 %v145, %v143
    %v172 = vpack.c.b16 %v146, %v144
    %v173 = vpack.c.b16 %v149, %v147
    %v174 = vpack.c.b16 %v150, %v148
    %v175 = vpack.c.b16 %v153, %v151
    %v176 = vpack.c.b16 %v154, %v152
    %v177 = vpack.c.b16 %v157, %v155
    %v178 = vpack.c.b16 %v158, %v156
    %v179 = vpack.c.b16 %v161, %v159
    %v180 = vpack.c.b16 %v162, %v160
    %v181 = vpack.c.b16 %v165, %v163
    %v182 = vpack.c.b16 %v166, %v164
    %199 = vmatpush.bf16.msra.mxu0 %v181
    %200 = vmatpush.bf16.msra.mxu0 %v179
    %201 = vmatpush.bf16.msra.mxu0 %v177
    %202 = vmatpush.bf16.msra.mxu0 %v175
    %203 = vmatpush.bf16.msra.mxu0 %v173
    %204 = vmatpush.bf16.msra.mxu0 %v171
    %205 = vmatpush.bf16.msra.mxu0 %v169
    %206 = vmatpush.bf16.msra.mxu0 %v167
    %207 = vmatmul.bf16.gmra.mxu0 %v96
    %v208 = vpop.f32.mrf.mxu0
    %v209 = vadd.f32 %v115, %v208
    %v210 = vpop.f32.mrf.mxu0
    %v211 = vadd.f32 %v115, %v210
    %212 = vdwg.mxu0
    %213 = vmatpush.bf16.msra.mxu0 %v182
    %214 = vmatpush.bf16.msra.mxu0 %v180
    %215 = vmatpush.bf16.msra.mxu0 %v178
    %216 = vmatpush.bf16.msra.mxu0 %v176
    %217 = vmatpush.bf16.msra.mxu0 %v174
    %218 = vmatpush.bf16.msra.mxu0 %v172
    %219 = vmatpush.bf16.msra.mxu0 %v170
    %220 = vmatpush.bf16.msra.mxu0 %v168
    %221 = vmatmul.bf16.gmra.mxu0 %v96
    %v222 = vpop.f32.mrf.mxu0
    %v223 = vadd.f32 %v116, %v222
    %v224 = vpop.f32.mrf.mxu0
    %v225 = vadd.f32 %v116, %v224
    %226 = vdwg.mxu0
    %v227 = vmin.f32 %v209, 20.0
    %v228 = vmin.f32 %v223, 20.0
    %v229 = vmin.f32 %v211, 20.0
    %v230 = vmin.f32 %v225, 20.0
    %v231 = vmul.f32 %v227, 1.442695
    %v232 = vpow.pop %v231
    %v233 = vmul.f32 %v228, 1.442695
    %v234 = vpow.pop %v233
    %v235 = vmul.f32 %v229, 1.442695
    %v236 = vpow.pop %v235
    %v237 = vmul.f32 %v230, 1.442695
    %v238 = vpow.pop %v237
    %v239 = vadd.f32 %v232, 1.0
    %v240 = vadd.f32 %v234, 1.0
    %v241 = vadd.f32 %v236, 1.0
    %v242 = vadd.f32 %v238, 1.0
    %v243 = vmul.f32 %v239, %v239
    %v244 = vmul.f32 %v240, %v240
    %v245 = vmul.f32 %v241, %v241
    %v246 = vmul.f32 %v242, %v242
    %v247 = vsub.f32 %v243, 1.0
    %v248 = vsub.f32 %v244, 1.0
    %v249 = vsub.f32 %v245, 1.0
    %v250 = vsub.f32 %v246, 1.0
    %v251 = vmul.f32 %v209, %v247
    %v252 = vmul.f32 %v223, %v248
    %v253 = vmul.f32 %v211, %v249
    %v254 = vmul.f32 %v225, %v250
    %v255 = vadd.f32 %v243, 1.0
    %v256 = vadd.f32 %v244, 1.0
    %v257 = vadd.f32 %v245, 1.0
    %v258 = vadd.f32 %v246, 1.0
    %v259 = vrcp.pop %v255
    %v260 = vrcp.pop %v256
    %v261 = vrcp.pop %v257
    %v262 = vrcp.pop %v258
    %v263 = vmul.f32 %v251, %v259
    %v264 = vmul.f32 %v252, %v260
    %v265 = vmul.f32 %v253, %v261
    %v266 = vmul.f32 %v254, %v262
    %v267 = vld [vmem:[#allocation2] sm:$0xff]
    %v268 = vld [vmem:[#allocation2 + $0x8] sm:$0xff]
    %v269 = vpack.c.bf16 %v265, %v263
    %v270 = vpack.c.bf16 %v266, %v264
    %v271 = vld [vmem:[#allocation9] sm:$0xf]
    %v272 = vld [vmem:[#allocation9 + $0x4] sm:$0xf]
    %v273 = vld [vmem:[#allocation9 + $0x8] sm:$0xf]
    %v274 = vld [vmem:[#allocation9 + $0xc] sm:$0xf]
    %v275 = vld [vmem:[#allocation9 + $0x10] sm:$0xf]
    %v276 = vld [vmem:[#allocation9 + $0x14] sm:$0xf]
    %v277 = vld [vmem:[#allocation9 + $0x18] sm:$0xf]
    %v278 = vld [vmem:[#allocation9 + $0x1c] sm:$0xf]
    %v279 = vld [vmem:[#allocation9 + $0x20] sm:$0xf]
    %v280 = vld [vmem:[#allocation9 + $0x24] sm:$0xf]
    %v281 = vld [vmem:[#allocation9 + $0x28] sm:$0xf]
    %v282 = vld [vmem:[#allocation9 + $0x2c] sm:$0xf]
    %v283 = vld [vmem:[#allocation9 + $0x30] sm:$0xf]
    %v284 = vld [vmem:[#allocation9 + $0x34] sm:$0xf]
    %v285 = vld [vmem:[#allocation9 + $0x38] sm:$0xf]
    %v286 = vld [vmem:[#allocation9 + $0x3c] sm:$0xf]
    %v287 = vld [vmem:[#allocation9 + $0x40] sm:$0xf]
    %v288 = vld [vmem:[#allocation9 + $0x44] sm:$0xf]
    %v289 = vld [vmem:[#allocation9 + $0x48] sm:$0xf]
    %v290 = vld [vmem:[#allocation9 + $0x4c] sm:$0xf]
    %v291 = vld [vmem:[#allocation9 + $0x50] sm:$0xf]
    %v292 = vld [vmem:[#allocation9 + $0x54] sm:$0xf]
    %v293 = vld [vmem:[#allocation9 + $0x58] sm:$0xf]
    %v294 = vld [vmem:[#allocation9 + $0x5c] sm:$0xf]
    %v295 = vld [vmem:[#allocation9 + $0x60] sm:$0xf]
    %v296 = vld [vmem:[#allocation9 + $0x64] sm:$0xf]
    %v297 = vld [vmem:[#allocation9 + $0x68] sm:$0xf]
    %v298 = vld [vmem:[#allocation9 + $0x6c] sm:$0xf]
    %v299 = vld [vmem:[#allocation9 + $0x70] sm:$0xf]
    %v300 = vld [vmem:[#allocation9 + $0x74] sm:$0xf]
    %v301 = vld [vmem:[#allocation9 + $0x78] sm:$0xf]
    %v302 = vld [vmem:[#allocation9 + $0x7c] sm:$0xf]
    %v335 = vunpack.c.l.b16 %v271
    %v336 = vunpack.c.l.b16 %v272
    %v337 = vunpack.c.l.b16 %v273
    %v338 = vunpack.c.l.b16 %v274
    %v339 = vunpack.c.l.b16 %v275
    %v340 = vunpack.c.l.b16 %v276
    %v341 = vunpack.c.l.b16 %v277
    %v342 = vunpack.c.l.b16 %v278
    %v343 = vunpack.c.l.b16 %v279
    %v344 = vunpack.c.l.b16 %v280
    %v345 = vunpack.c.l.b16 %v281
    %v346 = vunpack.c.l.b16 %v282
    %v347 = vunpack.c.l.b16 %v283
    %v348 = vunpack.c.l.b16 %v284
    %v349 = vunpack.c.l.b16 %v285
    %v350 = vunpack.c.l.b16 %v286
    %v351 = vunpack.c.l.b16 %v287
    %v352 = vunpack.c.l.b16 %v288
    %v353 = vunpack.c.l.b16 %v289
    %v354 = vunpack.c.l.b16 %v290
    %v355 = vunpack.c.l.b16 %v291
    %v356 = vunpack.c.l.b16 %v292
    %v357 = vunpack.c.l.b16 %v293
    %v358 = vunpack.c.l.b16 %v294
    %v359 = vunpack.c.l.b16 %v295
    %v360 = vunpack.c.l.b16 %v296
    %v361 = vunpack.c.l.b16 %v297
    %v362 = vunpack.c.l.b16 %v298
    %v363 = vunpack.c.l.b16 %v299
    %v364 = vunpack.c.l.b16 %v300
    %v365 = vunpack.c.l.b16 %v301
    %v366 = vunpack.c.l.b16 %v302
    %v367 = vpack.c.b16 %v336, %v335
    %v368 = vpack.c.b16 %v338, %v337
    %v369 = vpack.c.b16 %v340, %v339
    %v370 = vpack.c.b16 %v342, %v341
    %v371 = vpack.c.b16 %v344, %v343
    %v372 = vpack.c.b16 %v346, %v345
    %v373 = vpack.c.b16 %v348, %v347
    %v374 = vpack.c.b16 %v350, %v349
    %v375 = vpack.c.b16 %v352, %v351
    %v376 = vpack.c.b16 %v354, %v353
    %v377 = vpack.c.b16 %v356, %v355
    %v378 = vpack.c.b16 %v358, %v357
    %v379 = vpack.c.b16 %v360, %v359
    %v380 = vpack.c.b16 %v362, %v361
    %v381 = vpack.c.b16 %v364, %v363
    %v382 = vpack.c.b16 %v366, %v365
    %399 = vmatpush.bf16.msra.mxu0 %v374
    %400 = vmatpush.bf16.msra.mxu0 %v373
    %401 = vmatpush.bf16.msra.mxu0 %v372
    %402 = vmatpush.bf16.msra.mxu0 %v371
    %403 = vmatpush.bf16.msra.mxu0 %v370
    %404 = vmatpush.bf16.msra.mxu0 %v369
    %405 = vmatpush.bf16.msra.mxu0 %v368
    %406 = vmatpush.bf16.msra.mxu0 %v367
    %407 = vmatmul.bf16.gmra.mxu0 %v269
    %v408 = vpop.f32.mrf.mxu0
    %v409 = vadd.f32 0.0, %v408
    %v410 = vpop.f32.mrf.mxu0
    %v411 = vadd.f32 0.0, %v410
    %412 = vdwg.mxu0
    %413 = vmatpush.bf16.msra.mxu0 %v382
    %414 = vmatpush.bf16.msra.mxu0 %v381
    %415 = vmatpush.bf16.msra.mxu0 %v380
    %416 = vmatpush.bf16.msra.mxu0 %v379
    %417 = vmatpush.bf16.msra.mxu0 %v378
    %418 = vmatpush.bf16.msra.mxu0 %v377
    %419 = vmatpush.bf16.msra.mxu0 %v376
    %420 = vmatpush.bf16.msra.mxu0 %v375
    %421 = vmatmul.bf16.gmra.mxu0 %v270
    %v422 = vpop.f32.mrf.mxu0
    %v423 = vadd.f32 %v409, %v422
    %v424 = vpop.f32.mrf.mxu0
    %v425 = vadd.f32 %v411, %v424
    %426 = vdwg.mxu0
    %v427 = vadd.f32 %v267, %v423
    %v428 = vadd.f32 %v268, %v425
    %429 = vst [vmem:[#allocation2] sm:$0xff] %v427
    %430 = vst [vmem:[#allocation2 + $0x8] sm:$0xff] %v428
    // Predicated region
    $region50: #{tpu_custom_call.1} parent=1 // pred_check
      %p431 = pneg %p88
    $region51: #{tpu_custom_call.1} parent=1 // pred_check_branch
      %433 = sbr.rel (%p431) target = $region53
    $region52: #{tpu_custom_call.1} parent=1 // pred_region
      %v434 = vld [vmem:[#allocation3] sm:$0xff]
      %v435 = vld [vmem:[#allocation3 + $0x8] sm:$0xff]
      %v436 = vld [vmem:[#allocation2] sm:$0xff]
      %v437 = vld [vmem:[#allocation2 + $0x8] sm:$0xff]
      %v438 = vld [vmem:[%s4] sm:$0x1]
      %v440 = vperm.slane %v438, 0
      %v442 = vadd.f32 %v436, %v440
      %v443 = vadd.f32 %v437, %v440
      %v444 = vadd.f32 %v442, %v434
      %v445 = vadd.f32 %v443, %v435
      %446 = vadd.xlane.f32.xlu0 %v444
      %v447 = vpop.xlane.xlu0 %446
      %448 = vadd.xlane.f32.xlu0 %v445
      %v449 = vpop.xlane.xlu0 %448
      %v450 = vrcp.pop 128.0
      %v451 = vmul.f32 128.0, %v450
      %v452 = vsub.f32 1.0, %v451
      %v453 = vmul.f32 %v450, %v452
      %v454 = vadd.f32 %v450, %v453
      %vm455 = vweird.f32 %v450
      %v456 = vsel %vm455, %v450, %v454
      %v457 = vmul.f32 %v447, %v456
      %v458 = vmul.f32 %v449, %v456
      %v459 = vsub.f32 %v444, %v457
      %v460 = vsub.f32 %v445, %v458
      %v461 = vmul.f32 %v459, %v459
      %v462 = vmul.f32 %v460, %v460
      %463 = vadd.xlane.f32.xlu0 %v461
      %v464 = vpop.xlane.xlu0 %463
      %465 = vadd.xlane.f32.xlu0 %v462
      %v466 = vpop.xlane.xlu0 %465
      %v467 = vmul.f32 %v464, %v456
      %v468 = vmul.f32 %v466, %v456
      %v469 = vadd.f32 %v467, 1e-06
      %v470 = vadd.f32 %v468, 1e-06
      %v471 = vrsqrt.pop %v469
      %v472 = vmul.f32 %v471, %v469
      %v473 = vmul.f32 %v472, %v471
      %v474 = vmul.f32 0.5, %v473
      %v475 = vsub.f32 1.5, %v474
      %v476 = vmul.f32 %v471, %v475
      %vm477 = vweird.f32 %v469
      %vm478 = vweird.f32 %v471
      %vm479 = vmor %vm477, %vm478
      %v480 = vsel %vm479, %v471, %v476
      %v481 = vrsqrt.pop %v470
      %v482 = vmul.f32 %v481, %v470
      %v483 = vmul.f32 %v482, %v481
      %v484 = vmul.f32 0.5, %v483
      %v485 = vsub.f32 1.5, %v484
      %v486 = vmul.f32 %v481, %v485
      %vm487 = vweird.f32 %v470
      %vm488 = vweird.f32 %v481
      %vm489 = vmor %vm487, %vm488
      %v490 = vsel %vm489, %v481, %v486
      %v491 = vmul.f32 %v459, %v480
      %v492 = vmul.f32 %v460, %v490
      %v493 = vld [vmem:[%s5] sm:$0x1]
      %v495 = vperm.slane %v493, 0
      %v497 = vmul.f32 %v491, %v495
      %v498 = vmul.f32 %v492, %v495
      %v499 = vld [vmem:[%s6] sm:$0x1]
      %v501 = vperm.slane %v499, 0
      %v503 = vadd.f32 %v497, %v501
      %v504 = vadd.f32 %v498, %v501
      %505 = vst [vmem:[#allocation11] sm:$0xff] %v503
      %506 = vst [vmem:[#allocation11 + $0x8] sm:$0xff] %v504
    $region53: #{tpu_custom_call.1} parent=1 // pred_fallthru
      _
    // Predicated region
    $region54: #{tpu_custom_call.1} parent=1 // pred_check
      _
    $region55: #{tpu_custom_call.1} parent=1 // pred_check_branch
      %508 = sbr.rel (0) target = $region57
    $region56: #{tpu_custom_call.1} parent=1 // pred_region
      %510 = vsyncadd [#allocation5], 0
      %s511 = sshll.u32 [#allocation11], 4
      %s512 = int_to_ptr.vmem [resolvable:$true] %s511
      %s513 = sshll.u32 %s7, 4
      %s514 = int_to_ptr.hbm [resolvable:$true] %s513
      %519 = dma.vmem_to_hbm [thread:$0]  %s512, 256, %s514, [#allocation5], 128, 128, 8
    $region57: #{tpu_custom_call.1} parent=1 // pred_fallthru
      _
    // Predicated region
    $region58: #{tpu_custom_call.1} parent=1 // pred_check
      _
    $region59: #{tpu_custom_call.1} parent=1 // pred_check_branch
      %521 = sbr.rel (0) target = $region61
    $region60: #{tpu_custom_call.1} parent=1 // pred_region
      %523 = dma.done [#allocation5], 256
    $region61: #{tpu_custom_call.1} parent=1 // pred_fallthru
      _
    %524 = vsyncpa [#allocation4], 1
    %525 = vsyncpa [#allocation7], 1
    %526 = vsyncpa [#allocation10], 1
    %527 = vsyncpa [#allocation5], 1

</llo_original>
